<compile_context>
chip_gen: v7x
topology: tpu7x:2x2x1
jax: 0.10.0
libtpu: 0.0.40
codegen_flags: <defaults>
</compile_context>

<pallas_src>
import functools

import jax
import jax.numpy as jnp
from jax.experimental import pallas as pl
from jax.experimental.pallas import tpu as pltpu

# ---------------------------------------------------------------------------
# Parameter-slab layout (rows of a (424, 128) f32 buffer; all offsets are
# multiples of 8 so every static slice is sublane-tile aligned).
# ---------------------------------------------------------------------------
_F = 128              # padded feature / lane width used for the matmuls
_OUT_LANES = 8        # stored output lanes (real logits live in lanes 0..1)
_W1, _B1 = 0, 8       # w1: (4,128)   rows 0..3    (real cols 0..31)
_W2, _B2 = 16, 144    # w2: (128,128) rows 16..143 (real rows 0..31, cols 0..63)
_W3, _B3 = 152, 280   # w3: (128,128) rows 152..279 (real rows 0..63, cols 0..127)
_W4, _B4 = 288, 416   # w4: (128,128) rows 288..415 (real cols 0..1)
_SLAB_ROWS = 424


def _round_up(n, m):
    return ((n + m - 1) // m) * m


def _mlp_kernel(x_ref, p_ref, o_ref, *, bf16_dots: bool):
    # x tile: (TB, 4) f32.  Weight slab p_ref: (424, 128) f32, VMEM-resident.
    x = x_ref[...]

    def dot(a, w):
        # Optional bf16 MXU inputs (v5e) -- accumulation stays f32.
        if bf16_dots:
            a = a.astype(jnp.bfloat16)
            w = w.astype(jnp.bfloat16)
        return jnp.dot(a, w, preferred_element_type=jnp.float32)

    # fc1 + relu  (K=4, N padded to 128; padded lanes get bias 0 -> relu -> 0)
    h = jnp.dot(x, p_ref[_W1:_W1 + 4, :], preferred_element_type=jnp.float32)
    h = jnp.maximum(h + p_ref[_B1:_B1 + 1, :], 0.0)

    # fc2 + relu  (zero-padded 128x128 weights keep padding lanes exactly 0)
    h = dot(h, p_ref[_W2:_W2 + _F, :])
    h = jnp.maximum(h + p_ref[_B2:_B2 + 1, :], 0.0)

    # fc3 + relu
    h = dot(h, p_ref[_W3:_W3 + _F, :])
    h = jnp.maximum(h + p_ref[_B3:_B3 + 1, :], 0.0)

    # fc4 (no activation) -- full 128-lane math in vregs, narrow (TB, 8) store.
    h = dot(h, p_ref[_W4:_W4 + _F, :])
    o_ref[...] = (h + p_ref[_B4:_B4 + 1, :])[:, :_OUT_LANES]


def pack_params(params):
    """Pack the 8 weight/bias tensors into one zero-padded (424, 128) slab."""
    slab = jnp.zeros((_SLAB_ROWS, _F), jnp.float32)
    slab = slab.at[_W1:_W1 + 4, 0:32].set(params["w1"])
    slab = slab.at[_B1, 0:32].set(params["b1"].reshape(32))
    slab = slab.at[_W2:_W2 + 32, 0:64].set(params["w2"])
    slab = slab.at[_B2, 0:64].set(params["b2"].reshape(64))
    slab = slab.at[_W3:_W3 + 64, 0:128].set(params["w3"])
    slab = slab.at[_B3, 0:128].set(params["b3"].reshape(128))
    slab = slab.at[_W4:_W4 + 128, 0:2].set(params["w4"])
    slab = slab.at[_B4, 0:2].set(params["b4"].reshape(2))
    return slab


def network_forward(x, slab, *, tb=2048, bf16_dots=False):
    """x: (B, 4) f32, slab: packed (424, 128) params.  Returns (B, 2) f32."""
    B = x.shape[0]

    # Batch tile: multiple of 8, capped at `tb`.  Also cap so a call gets
    # >=2 (ideally 4) grid tiles when the batch allows it, so both v7x
    # TensorCores are fed via the "parallel" grid axis.
    B8 = _round_up(B, 8)
    TB = min(tb, B8)
    if B8 >= 32:
        TB = min(TB, _round_up(pl.cdiv(B8, 4), 8))
    elif B8 >= 16:
        TB = min(TB, _round_up(pl.cdiv(B8, 2), 8))
    TB = max(TB, 8)

    grid = (pl.cdiv(B, TB),)   # ragged tail handled by Pallas block clipping
    kernel = functools.partial(_mlp_kernel, bf16_dots=bf16_dots)

    out = pl.pallas_call(
        kernel,
        out_shape=jax.ShapeDtypeStruct((B, _OUT_LANES), jnp.float32),
        grid_spec=pltpu.PrefetchScalarGridSpec(
            num_scalar_prefetch=0,
            grid=grid,
            in_specs=[
                # activations: tiled over batch, pipelined
                pl.BlockSpec((TB, 4), lambda i: (i, 0)),
                # packed params: constant block index -> fetched once, resident
                pl.BlockSpec((_SLAB_ROWS, _F), lambda i: (0, 0)),
            ],
            # narrow, 8-lane output block (last dim == full array dim)
            out_specs=pl.BlockSpec((TB, _OUT_LANES), lambda i: (i, 0)),
        ),
        compiler_params=pltpu.CompilerParams(
            dimension_semantics=("parallel",),  # shard batch over TCs (v7x)
        ),
    )(x, slab)
    return out[:, :2]


def init_params(key):
    """PyTorch nn.Linear default init: U(-1/sqrt(fan_in), 1/sqrt(fan_in))."""
    sizes = [(4, 32), (32, 64), (64, 128), (128, 2)]
    params = {}
    for i, (fan_in, fan_out) in enumerate(sizes, start=1):
        key, kw, kb = jax.random.split(key, 3)
        bound = 1.0 / jnp.sqrt(jnp.float32(fan_in))
        # weight stored (in, out) so the kernel does x @ W (== x @ W_pt.T)
        params[f"w{i}"] = jax.random.uniform(
            kw, (fan_in, fan_out), jnp.float32, -bound, bound)
        params[f"b{i}"] = jax.random.uniform(
            kb, (1, fan_out), jnp.float32, -bound, bound)
    return params


def _reference_forward(x, p):
    h = jnp.maximum(x @ p["w1"] + p["b1"], 0.0)
    h = jnp.maximum(h @ p["w2"] + p["b2"], 0.0)
    h = jnp.maximum(h @ p["w3"] + p["b3"], 0.0)
    return h @ p["w4"] + p["b4"]


if __name__ == "__main__":
    key = jax.random.PRNGKey(0)
    key, kx1, kx2 = jax.random.split(key, 3)
    params = init_params(key)
    slab = pack_params(params)

    # 1) tiny batch (per-env action selection): single grid step
    batch = 8
    x = jax.random.normal(kx1, (batch, 4), dtype=jnp.float32)
    out = jax.block_until_ready(network_forward(x, slab))
    ref = _reference_forward(x, params)
    assert out.shape == (batch, 2), out.shape
    assert jnp.allclose(out, ref, atol=1e-5, rtol=1e-5), "mismatch vs reference (B=8)"

    # 2) small multi-tile batch with a ragged tail: exercises the batch grid,
    #    pipelining, and the clipped (un-padded) tail block.
    batch2 = 100
    x2 = jax.random.normal(kx2, (batch2, 4), dtype=jnp.float32)
    out2 = jax.block_until_ready(network_forward(x2, slab, tb=32))
    ref2 = _reference_forward(x2, params)
    assert out2.shape == (batch2, 2), out2.shape
    assert jnp.allclose(out2, ref2, atol=1e-5, rtol=1e-5), "mismatch vs reference (B=100)"

    # 3) same ragged batch through the auto tile-size path (default tb=2048,
    #    capped to >=2 tiles) and the optional bf16-dot path (v5e), with a
    #    correspondingly loose tolerance.
    out3 = jax.block_until_ready(network_forward(x2, slab, bf16_dots=True))
    assert out3.shape == (batch2, 2), out3.shape
    assert jnp.allclose(out3, ref2, atol=5e-2, rtol=5e-2), "mismatch vs reference (bf16)"

    print("KERNEL_OK")
</pallas_src>

<mosaic_0001>
module attributes {stable_mosaic.version = 11 : i64} {
  func.func @_mlp_kernel(%arg0: i32, %arg1: memref<8x4xf32, #tpu.memory_space<vmem>>, %arg2: memref<424x128xf32, #tpu.memory_space<vmem>>, %arg3: memref<8x8xf32, #tpu.memory_space<vmem>>) attributes {dimension_semantics = [#tpu.dimension_semantics<parallel>], iteration_bounds = array<i64: 1>, scalar_prefetch = 0 : i64, scratch_operands = 0 : i64, tpu.core_type = #tpu.core_type<tc>, window_params = [{transform_indices = @transform_0, window_bounds = array<i64: 8, 4>}, {pipeline_mode = #tpu.pipeline_mode<synchronous>, transform_indices = @transform_1, window_bounds = array<i64: 424, 128>}, {transform_indices = @transform_2, window_bounds = array<i64: 8, 8>}]} {
    %c0 = arith.constant 0 : index
    %c0_0 = arith.constant 0 : index
    %0 = vector.load %arg1[%c0, %c0_0] : memref<8x4xf32, #tpu.memory_space<vmem>>, vector<8x4xf32>
    %c0_1 = arith.constant 0 : index
    %c0_2 = arith.constant 0 : index
    %1 = vector.load %arg2[%c0_1, %c0_2] : memref<424x128xf32, #tpu.memory_space<vmem>>, vector<4x128xf32>
    %cst = arith.constant dense<0.000000e+00> : vector<8x128xf32>
    %2 = tpu.matmul %0, %1, %cst {dimension_numbers = #tpu.dot_dimension_numbers<[1], [0], [0], [1], [0, 0, 1, 1], [], []>} : vector<8x4xf32>, vector<4x128xf32>, vector<8x128xf32> -> vector<8x128xf32>
    %c8 = arith.constant 8 : index
    %c0_3 = arith.constant 0 : index
    %3 = vector.load %arg2[%c8, %c0_3] : memref<424x128xf32, #tpu.memory_space<vmem>>, vector<1x128xf32>
    %4 = vector.broadcast %3 : vector<1x128xf32> to vector<8x128xf32>
    %5 = arith.addf %2, %4 : vector<8x128xf32>
    %cst_4 = arith.constant 0.000000e+00 : f32
    %6 = vector.broadcast %cst_4 : f32 to vector<8x128xf32>
    %7 = arith.maximumf %5, %6 : vector<8x128xf32>
    %c16 = arith.constant 16 : index
    %c0_5 = arith.constant 0 : index
    %8 = vector.load %arg2[%c16, %c0_5] : memref<424x128xf32, #tpu.memory_space<vmem>>, vector<128x128xf32>
    %cst_6 = arith.constant dense<0.000000e+00> : vector<8x128xf32>
    %9 = tpu.matmul %7, %8, %cst_6 {dimension_numbers = #tpu.dot_dimension_numbers<[1], [0], [0], [1], [0, 0, 1, 1], [], []>} : vector<8x128xf32>, vector<128x128xf32>, vector<8x128xf32> -> vector<8x128xf32>
    %c144 = arith.constant 144 : index
    %c0_7 = arith.constant 0 : index
    %10 = vector.load %arg2[%c144, %c0_7] : memref<424x128xf32, #tpu.memory_space<vmem>>, vector<1x128xf32>
    %11 = vector.broadcast %10 : vector<1x128xf32> to vector<8x128xf32>
    %12 = arith.addf %9, %11 : vector<8x128xf32>
    %cst_8 = arith.constant 0.000000e+00 : f32
    %13 = vector.broadcast %cst_8 : f32 to vector<8x128xf32>
    %14 = arith.maximumf %12, %13 : vector<8x128xf32>
    %c152 = arith.constant 152 : index
    %c0_9 = arith.constant 0 : index
    %15 = vector.load %arg2[%c152, %c0_9] : memref<424x128xf32, #tpu.memory_space<vmem>>, vector<128x128xf32>
    %cst_10 = arith.constant dense<0.000000e+00> : vector<8x128xf32>
    %16 = tpu.matmul %14, %15, %cst_10 {dimension_numbers = #tpu.dot_dimension_numbers<[1], [0], [0], [1], [0, 0, 1, 1], [], []>} : vector<8x128xf32>, vector<128x128xf32>, vector<8x128xf32> -> vector<8x128xf32>
    %c280 = arith.constant 280 : index
    %c0_11 = arith.constant 0 : index
    %17 = vector.load %arg2[%c280, %c0_11] : memref<424x128xf32, #tpu.memory_space<vmem>>, vector<1x128xf32>
    %18 = vector.broadcast %17 : vector<1x128xf32> to vector<8x128xf32>
    %19 = arith.addf %16, %18 : vector<8x128xf32>
    %cst_12 = arith.constant 0.000000e+00 : f32
    %20 = vector.broadcast %cst_12 : f32 to vector<8x128xf32>
    %21 = arith.maximumf %19, %20 : vector<8x128xf32>
    %c288 = arith.constant 288 : index
    %c0_13 = arith.constant 0 : index
    %22 = vector.load %arg2[%c288, %c0_13] : memref<424x128xf32, #tpu.memory_space<vmem>>, vector<128x128xf32>
    %cst_14 = arith.constant dense<0.000000e+00> : vector<8x128xf32>
    %23 = tpu.matmul %21, %22, %cst_14 {dimension_numbers = #tpu.dot_dimension_numbers<[1], [0], [0], [1], [0, 0, 1, 1], [], []>} : vector<8x128xf32>, vector<128x128xf32>, vector<8x128xf32> -> vector<8x128xf32>
    %c416 = arith.constant 416 : index
    %c0_15 = arith.constant 0 : index
    %24 = vector.load %arg2[%c416, %c0_15] : memref<424x128xf32, #tpu.memory_space<vmem>>, vector<1x128xf32>
    %25 = vector.broadcast %24 : vector<1x128xf32> to vector<8x128xf32>
    %26 = arith.addf %23, %25 : vector<8x128xf32>
    %27 = vector.extract_strided_slice %26 {offsets = [0, 0], sizes = [8, 8], strides = [1, 1]} : vector<8x128xf32> to vector<8x8xf32>
    %c0_16 = arith.constant 0 : index
    %c0_17 = arith.constant 0 : index
    %28 = vector.load %arg3[%c0_16, %c0_17] : memref<8x8xf32, #tpu.memory_space<vmem>>, vector<8x8xf32>
    tpu.vector_store %arg3[%c0_16, %c0_17], %27 {strides = array<i32>} : memref<8x8xf32, #tpu.memory_space<vmem>>, vector<8x8xf32>,
    return
  }
  func.func @transform_0(%arg0: i32) -> (i32, i32) {
    %c0_i32 = arith.constant 0 : i32
    %c0_i32_0 = arith.constant 0 : i32
    return %arg0, %c0_i32 : i32, i32
  }
  func.func @transform_1(%arg0: i32) -> (i32, i32) {
    %c0_i32 = arith.constant 0 : i32
    %c0_i32_0 = arith.constant 0 : i32
    %c0_i32_1 = arith.constant 0 : i32
    return %c0_i32, %c0_i32_0 : i32, i32
  }
  func.func @transform_2(%arg0: i32) -> (i32, i32) {
    %c0_i32 = arith.constant 0 : i32
    %c0_i32_0 = arith.constant 0 : i32
    return %arg0, %c0_i32 : i32, i32
  }
}

</mosaic_0001>

<llo_original>
// kernel: tpu_custom_call.1
$region0: #{tpu_custom_call.1}
  #allocation0 [shape = 'u32[]', space=smem, size = 0x4, offset = 0x4, fixed_abs, tag = 'smem constant byte address 0x4 - core index']
  #allocation1 [shape = 'u32[144,128]{1,0:T(1,128)}', space=vmem, size = 0x12000, scoped, tag = 'internal scratch']
  %s0 = inlined_call_operand.vmem [shape: f32[8,4], index: 0, kind: input, shape index: {}]
  %s1 = inlined_call_operand.hbm [shape: f32[424,128], index: 1, kind: input, shape index: {}]
  %s2 = inlined_call_operand.hbm [shape: f32[8,8], index: 2, kind: output, shape index: {}]
  %s3 = sld [smem:[#allocation0]]
  $region22: #{tpu_custom_call.1} parent=0
    _
  %s5 = ssub.s32 1, %s3
  %s6 = scalar_select 0, %s5, %s3
  $region1: #{tpu_custom_call.1} parent=0
    #allocation2 [shape = 'u8[217088]{0}', space=vmem, size = 0x35000, scoped, tag = 'input window, operand 1, single buffered']
    #allocation3 [shape = 's32[1]{0}', space=sflag, size = 0x4, scoped, tag = 'scoped memory for tpu_custom_call.1']
    #allocation4 [shape = 's32[1]{0}', space=sflag, size = 0x4, scoped, tag = 'scoped memory for tpu_custom_call.1']
    #allocation5 [shape = 'u8[4096]{0}', space=vmem, size = 0x1000, scoped, tag = 'output window, operand 0, single buffered']
    %7 = vsyncpa [#allocation3], 0
    %8 = vsyncpa [#allocation4], 0
    // Predicated region
    $region2: #{tpu_custom_call.1} parent=1 // pred_check
      _
    $region3: #{tpu_custom_call.1} parent=1 // pred_check_branch
      %10 = sbr.rel (0) target = $region5
    $region4: #{tpu_custom_call.1} parent=1 // pred_region
      _
    $region5: #{tpu_custom_call.1} parent=1 // pred_fallthru
      _
    // Predicated region
    $region6: #{tpu_custom_call.1} parent=1 // pred_check
      _
    $region7: #{tpu_custom_call.1} parent=1 // pred_check_branch
      %12 = sbr.rel (0) target = $region9
    $region8: #{tpu_custom_call.1} parent=1 // pred_region
      %s14 = ssub.s32 6784, 6784
      %15 = vsyncadd [#allocation3], %s14
      %s16 = sshll.u32 [#allocation2], 4
      %s17 = int_to_ptr.vmem [resolvable:$true] %s16
      %22 = dma.hbm_to_vmem [thread:$0]  %s1, 6784, %s17, [#allocation3], 128, 128, 8
    $region9: #{tpu_custom_call.1} parent=1 // pred_fallthru
      _
    // Predicated region
    $region10: #{tpu_custom_call.1} parent=1 // pred_check
      _
    $region11: #{tpu_custom_call.1} parent=1 // pred_check_branch
      %24 = sbr.rel (0) target = $region13
    $region12: #{tpu_custom_call.1} parent=1 // pred_region
      %25 = dma.done [#allocation3], 6784
    $region13: #{tpu_custom_call.1} parent=1 // pred_fallthru
      _
    %v26 = vld [vmem:[%s0] sm:$0xff]
    %v27 = vld [vmem:[#allocation2] sm:$0xf]
    %v28 = vld [vmem:[#allocation2 + $0x8] sm:$0x1]
    %v29 = vlaneseq
    %v30 = vshrl.u32 %v29, 7
    %v31 = vsub.s32 0, %v30
    %v32 = vrot.slane %v28, %v31
    %vm33 = vcmask 31744
    %v35 = vsel %vm33, %v26, 0
    %vm37 = vcmask 1043456
    %v39 = vsel %vm37, %v27, 0
    %41 = vmatprep.subr.mxu0 0.0
    %42 = vmatpush1.msra.mxu0 %v39
    %43 = vmatprep.subr.mxu0 0.0
    %44 = vmatpush1.msra.mxu0 0.0
    %45 = vmatprep.subr.mxu0 0.0
    %46 = vmatpush1.msra.mxu0 0.0
    %47 = vmatprep.subr.mxu0 0.0
    %48 = vmatpush1.msra.mxu0 0.0
    %49 = vmatprep.subr.mxu0 0.0
    %50 = vmatpush1.msra.mxu0 0.0
    %51 = vmatprep.subr.mxu0 0.0
    %52 = vmatpush1.msra.mxu0 0.0
    %53 = vmatprep.subr.mxu0 0.0
    %54 = vmatpush1.msra.mxu0 0.0
    %55 = vmatprep.subr.mxu0 0.0
    %56 = vmatpush1.msra.mxu0 0.0
    %57 = vmatprep.subr.mxu0 0.0
    %58 = vmatpush1.msra.mxu0 0.0
    %59 = vmatprep.subr.mxu0 0.0
    %60 = vmatpush1.msra.mxu0 0.0
    %61 = vmatprep.subr.mxu0 0.0
    %62 = vmatpush1.msra.mxu0 0.0
    %63 = vmatprep.subr.mxu0 0.0
    %64 = vmatpush1.msra.mxu0 0.0
    %65 = vmatprep.subr.mxu0 0.0
    %66 = vmatpush1.msra.mxu0 0.0
    %67 = vmatprep.subr.mxu0 0.0
    %68 = vmatpush1.msra.mxu0 0.0
    %69 = vmatprep.subr.mxu0 0.0
    %70 = vmatpush1.msra.mxu0 0.0
    %71 = vmatprep.subr.mxu0 0.0
    %72 = vmatpush1.msra.mxu0 0.0
    %73 = vmatprep.subr.mxu0 0.0
    %74 = vmatpush1.msra.mxu0 0.0
    %75 = vmatprep.subr.mxu0 0.0
    %76 = vmatpush1.msra.mxu0 0.0
    %77 = vmatprep.subr.mxu0 0.0
    %78 = vmatpush1.msra.mxu0 0.0
    %79 = vmatprep.subr.mxu0 0.0
    %80 = vmatpush1.msra.mxu0 0.0
    %81 = vmatprep.subr.mxu0 0.0
    %82 = vmatpush1.msra.mxu0 0.0
    %83 = vmatprep.subr.mxu0 0.0
    %84 = vmatpush1.msra.mxu0 0.0
    %85 = vmatprep.subr.mxu0 0.0
    %86 = vmatpush1.msra.mxu0 0.0
    %87 = vmatprep.subr.mxu0 0.0
    %88 = vmatpush1.msra.mxu0 0.0
    %89 = vmatprep.subr.mxu0 0.0
    %90 = vmatpush1.msra.mxu0 0.0
    %91 = vmatprep.subr.mxu0 0.0
    %92 = vmatpush1.msra.mxu0 0.0
    %93 = vmatprep.subr.mxu0 0.0
    %94 = vmatpush1.msra.mxu0 0.0
    %95 = vmatprep.subr.mxu0 0.0
    %96 = vmatpush1.msra.mxu0 0.0
    %97 = vmatprep.subr.mxu0 0.0
    %98 = vmatpush1.msra.mxu0 0.0
    %99 = vmatprep.subr.mxu0 0.0
    %100 = vmatpush1.msra.mxu0 0.0
    %101 = vmatprep.subr.mxu0 0.0
    %102 = vmatpush1.msra.mxu0 0.0
    %103 = vmatprep.subr.mxu0 0.0
    %104 = vmatpush1.msra.mxu0 0.0
    %105 = vmatprep.mubr.f32.mxu0 0.0
    %106 = vmatmul.mubr.f32.gmra.mrb[0].mxu0 %v35
    %v107 = vpop.f32.mrb[0].mxu0
    %v108 = vadd.f32 %v32, %v107
    %v109 = vpop.f32.mrb[0].mxu0
    %110 = vdwg.mxu0
    %v111 = vmax.f32 %v108, 0.0
    %v112 = vld [vmem:[#allocation2 + $0x10] sm:$0xff]
    %v113 = vld [vmem:[#allocation2 + $0x18] sm:$0xff]
    %v114 = vld [vmem:[#allocation2 + $0x20] sm:$0xff]
    %v115 = vld [vmem:[#allocation2 + $0x28] sm:$0xff]
    %v116 = vld [vmem:[#allocation2 + $0x30] sm:$0xff]
    %v117 = vld [vmem:[#allocation2 + $0x38] sm:$0xff]
    %v118 = vld [vmem:[#allocation2 + $0x40] sm:$0xff]
    %v119 = vld [vmem:[#allocation2 + $0x48] sm:$0xff]
    %v120 = vld [vmem:[#allocation2 + $0x50] sm:$0xff]
    %v121 = vld [vmem:[#allocation2 + $0x58] sm:$0xff]
    %v122 = vld [vmem:[#allocation2 + $0x60] sm:$0xff]
    %v123 = vld [vmem:[#allocation2 + $0x68] sm:$0xff]
    %v124 = vld [vmem:[#allocation2 + $0x70] sm:$0xff]
    %v125 = vld [vmem:[#allocation2 + $0x78] sm:$0xff]
    %v126 = vld [vmem:[#allocation2 + $0x80] sm:$0xff]
    %v127 = vld [vmem:[#allocation2 + $0x88] sm:$0xff]
    %v128 = vld [vmem:[#allocation2 + $0x90] sm:$0x1]
    %v129 = vlaneseq
    %v130 = vshrl.u32 %v129, 7
    %v131 = vsub.s32 0, %v130
    %v132 = vrot.slane %v128, %v131
    %133 = vmatprep.subr.mxu0 0.0
    %134 = vmatpush1.msra.mxu0 %v112
    %135 = vmatprep.subr.mxu0 0.0
    %136 = vmatpush1.msra.mxu0 %v113
    %137 = vmatprep.subr.mxu0 0.0
    %138 = vmatpush1.msra.mxu0 %v114
    %139 = vmatprep.subr.mxu0 0.0
    %140 = vmatpush1.msra.mxu0 %v115
    %141 = vmatprep.subr.mxu0 0.0
    %142 = vmatpush1.msra.mxu0 %v116
    %143 = vmatprep.subr.mxu0 0.0
    %144 = vmatpush1.msra.mxu0 %v117
    %145 = vmatprep.subr.mxu0 0.0
    %146 = vmatpush1.msra.mxu0 %v118
    %147 = vmatprep.subr.mxu0 0.0
    %148 = vmatpush1.msra.mxu0 %v119
    %149 = vmatprep.subr.mxu0 0.0
    %150 = vmatpush1.msra.mxu0 %v120
    %151 = vmatprep.subr.mxu0 0.0
    %152 = vmatpush1.msra.mxu0 %v121
    %153 = vmatprep.subr.mxu0 0.0
    %154 = vmatpush1.msra.mxu0 %v122
    %155 = vmatprep.subr.mxu0 0.0
    %156 = vmatpush1.msra.mxu0 %v123
    %157 = vmatprep.subr.mxu0 0.0
    %158 = vmatpush1.msra.mxu0 %v124
    %159 = vmatprep.subr.mxu0 0.0
    %160 = vmatpush1.msra.mxu0 %v125
    %161 = vmatprep.subr.mxu0 0.0
    %162 = vmatpush1.msra.mxu0 %v126
    %163 = vmatprep.subr.mxu0 0.0
    %164 = vmatpush1.msra.mxu0 %v127
    %165 = vmatprep.subr.mxu0 0.0
    %166 = vmatpush1.msra.mxu0 0.0
    %167 = vmatprep.subr.mxu0 0.0
    %168 = vmatpush1.msra.mxu0 0.0
    %169 = vmatprep.subr.mxu0 0.0
    %170 = vmatpush1.msra.mxu0 0.0
    %171 = vmatprep.subr.mxu0 0.0
    %172 = vmatpush1.msra.mxu0 0.0
    %173 = vmatprep.subr.mxu0 0.0
    %174 = vmatpush1.msra.mxu0 0.0
    %175 = vmatprep.subr.mxu0 0.0
    %176 = vmatpush1.msra.mxu0 0.0
    %177 = vmatprep.subr.mxu0 0.0
    %178 = vmatpush1.msra.mxu0 0.0
    %179 = vmatprep.subr.mxu0 0.0
    %180 = vmatpush1.msra.mxu0 0.0
    %181 = vmatprep.subr.mxu0 0.0
    %182 = vmatpush1.msra.mxu0 0.0
    %183 = vmatprep.subr.mxu0 0.0
    %184 = vmatpush1.msra.mxu0 0.0
    %185 = vmatprep.subr.mxu0 0.0
    %186 = vmatpush1.msra.mxu0 0.0
    %187 = vmatprep.subr.mxu0 0.0
    %188 = vmatpush1.msra.mxu0 0.0
    %189 = vmatprep.subr.mxu0 0.0
    %190 = vmatpush1.msra.mxu0 0.0
    %191 = vmatprep.subr.mxu0 0.0
    %192 = vmatpush1.msra.mxu0 0.0
    %193 = vmatprep.subr.mxu0 0.0
    %194 = vmatpush1.msra.mxu0 0.0
    %195 = vmatprep.subr.mxu0 0.0
    %196 = vmatpush1.msra.mxu0 0.0
    %197 = vmatprep.mubr.f32.mxu0 0.0
    %198 = vmatmul.mubr.f32.gmra.mrb[0].mxu0 %v111
    %v199 = vpop.f32.mrb[0].mxu0
    %v200 = vadd.f32 %v132, %v199
    %v201 = vpop.f32.mrb[0].mxu0
    %202 = vdwg.mxu0
    %v203 = vmax.f32 %v200, 0.0
    %v204 = vld [vmem:[#allocation2 + $0x98] sm:$0xff]
    %v205 = vld [vmem:[#allocation2 + $0xa0] sm:$0xff]
    %v206 = vld [vmem:[#allocation2 + $0xa8] sm:$0xff]
    %v207 = vld [vmem:[#allocation2 + $0xb0] sm:$0xff]
    %v208 = vld [vmem:[#allocation2 + $0xb8] sm:$0xff]
    %v209 = vld [vmem:[#allocation2 + $0xc0] sm:$0xff]
    %v210 = vld [vmem:[#allocation2 + $0xc8] sm:$0xff]
    %v211 = vld [vmem:[#allocation2 + $0xd0] sm:$0xff]
    %v212 = vld [vmem:[#allocation2 + $0xd8] sm:$0xff]
    %v213 = vld [vmem:[#allocation2 + $0xe0] sm:$0xff]
    %v214 = vld [vmem:[#allocation2 + $0xe8] sm:$0xff]
    %v215 = vld [vmem:[#allocation2 + $0xf0] sm:$0xff]
    %v216 = vld [vmem:[#allocation2 + $0xf8] sm:$0xff]
    %v217 = vld [vmem:[#allocation2 + $0x100] sm:$0xff]
    %v218 = vld [vmem:[#allocation2 + $0x108] sm:$0xff]
    %v219 = vld [vmem:[#allocation2 + $0x110] sm:$0xff]
    %v220 = vld [vmem:[#allocation2 + $0x118] sm:$0x1]
    %v221 = vlaneseq
    %v222 = vshrl.u32 %v221, 7
    %v223 = vsub.s32 0, %v222
    %v224 = vrot.slane %v220, %v223
    %225 = vmatprep.subr.mxu0 0.0
    %226 = vmatpush1.msra.mxu0 %v204
    %227 = vmatprep.subr.mxu0 0.0
    %228 = vmatpush1.msra.mxu0 %v205
    %229 = vmatprep.subr.mxu0 0.0
    %230 = vmatpush1.msra.mxu0 %v206
    %231 = vmatprep.subr.mxu0 0.0
    %232 = vmatpush1.msra.mxu0 %v207
    %233 = vmatprep.subr.mxu0 0.0
    %234 = vmatpush1.msra.mxu0 %v208
    %235 = vmatprep.subr.mxu0 0.0
    %236 = vmatpush1.msra.mxu0 %v209
    %237 = vmatprep.subr.mxu0 0.0
    %238 = vmatpush1.msra.mxu0 %v210
    %239 = vmatprep.subr.mxu0 0.0
    %240 = vmatpush1.msra.mxu0 %v211
    %241 = vmatprep.subr.mxu0 0.0
    %242 = vmatpush1.msra.mxu0 %v212
    %243 = vmatprep.subr.mxu0 0.0
    %244 = vmatpush1.msra.mxu0 %v213
    %245 = vmatprep.subr.mxu0 0.0
    %246 = vmatpush1.msra.mxu0 %v214
    %247 = vmatprep.subr.mxu0 0.0
    %248 = vmatpush1.msra.mxu0 %v215
    %249 = vmatprep.subr.mxu0 0.0
    %250 = vmatpush1.msra.mxu0 %v216
    %251 = vmatprep.subr.mxu0 0.0
    %252 = vmatpush1.msra.mxu0 %v217
    %253 = vmatprep.subr.mxu0 0.0
    %254 = vmatpush1.msra.mxu0 %v218
    %255 = vmatprep.subr.mxu0 0.0
    %256 = vmatpush1.msra.mxu0 %v219
    %257 = vmatprep.subr.mxu0 0.0
    %258 = vmatpush1.msra.mxu0 0.0
    %259 = vmatprep.subr.mxu0 0.0
    %260 = vmatpush1.msra.mxu0 0.0
    %261 = vmatprep.subr.mxu0 0.0
    %262 = vmatpush1.msra.mxu0 0.0
    %263 = vmatprep.subr.mxu0 0.0
    %264 = vmatpush1.msra.mxu0 0.0
    %265 = vmatprep.subr.mxu0 0.0
    %266 = vmatpush1.msra.mxu0 0.0
    %267 = vmatprep.subr.mxu0 0.0
    %268 = vmatpush1.msra.mxu0 0.0
    %269 = vmatprep.subr.mxu0 0.0
    %270 = vmatpush1.msra.mxu0 0.0
    %271 = vmatprep.subr.mxu0 0.0
    %272 = vmatpush1.msra.mxu0 0.0
    %273 = vmatprep.subr.mxu0 0.0
    %274 = vmatpush1.msra.mxu0 0.0
    %275 = vmatprep.subr.mxu0 0.0
    %276 = vmatpush1.msra.mxu0 0.0
    %277 = vmatprep.subr.mxu0 0.0
    %278 = vmatpush1.msra.mxu0 0.0
    %279 = vmatprep.subr.mxu0 0.0
    %280 = vmatpush1.msra.mxu0 0.0
    %281 = vmatprep.subr.mxu0 0.0
    %282 = vmatpush1.msra.mxu0 0.0
    %283 = vmatprep.subr.mxu0 0.0
    %284 = vmatpush1.msra.mxu0 0.0
    %285 = vmatprep.subr.mxu0 0.0
    %286 = vmatpush1.msra.mxu0 0.0
    %287 = vmatprep.subr.mxu0 0.0
    %288 = vmatpush1.msra.mxu0 0.0
    %289 = vmatprep.mubr.f32.mxu0 0.0
    %290 = vmatmul.mubr.f32.gmra.mrb[0].mxu0 %v203
    %v291 = vpop.f32.mrb[0].mxu0
    %v292 = vadd.f32 %v224, %v291
    %v293 = vpop.f32.mrb[0].mxu0
    %294 = vdwg.mxu0
    %v295 = vmax.f32 %v292, 0.0
    %v296 = vld [vmem:[#allocation2 + $0x120] sm:$0xff]
    %v297 = vld [vmem:[#allocation2 + $0x128] sm:$0xff]
    %v298 = vld [vmem:[#allocation2 + $0x130] sm:$0xff]
    %v299 = vld [vmem:[#allocation2 + $0x138] sm:$0xff]
    %v300 = vld [vmem:[#allocation2 + $0x140] sm:$0xff]
    %v301 = vld [vmem:[#allocation2 + $0x148] sm:$0xff]
    %v302 = vld [vmem:[#allocation2 + $0x150] sm:$0xff]
    %v303 = vld [vmem:[#allocation2 + $0x158] sm:$0xff]
    %v304 = vld [vmem:[#allocation2 + $0x160] sm:$0xff]
    %v305 = vld [vmem:[#allocation2 + $0x168] sm:$0xff]
    %v306 = vld [vmem:[#allocation2 + $0x170] sm:$0xff]
    %v307 = vld [vmem:[#allocation2 + $0x178] sm:$0xff]
    %v308 = vld [vmem:[#allocation2 + $0x180] sm:$0xff]
    %v309 = vld [vmem:[#allocation2 + $0x188] sm:$0xff]
    %v310 = vld [vmem:[#allocation2 + $0x190] sm:$0xff]
    %v311 = vld [vmem:[#allocation2 + $0x198] sm:$0xff]
    %v312 = vld [vmem:[#allocation2 + $0x1a0] sm:$0x1]
    %v313 = vlaneseq
    %v314 = vshrl.u32 %v313, 7
    %v315 = vsub.s32 0, %v314
    %v316 = vrot.slane %v312, %v315
    %317 = vmatprep.subr.mxu0 0.0
    %318 = vmatpush1.msra.mxu0 %v296
    %319 = vmatprep.subr.mxu0 0.0
    %320 = vmatpush1.msra.mxu0 %v297
    %321 = vmatprep.subr.mxu0 0.0
    %322 = vmatpush1.msra.mxu0 %v298
    %323 = vmatprep.subr.mxu0 0.0
    %324 = vmatpush1.msra.mxu0 %v299
    %325 = vmatprep.subr.mxu0 0.0
    %326 = vmatpush1.msra.mxu0 %v300
    %327 = vmatprep.subr.mxu0 0.0
    %328 = vmatpush1.msra.mxu0 %v301
    %329 = vmatprep.subr.mxu0 0.0
    %330 = vmatpush1.msra.mxu0 %v302
    %331 = vmatprep.subr.mxu0 0.0
    %332 = vmatpush1.msra.mxu0 %v303
    %333 = vmatprep.subr.mxu0 0.0
    %334 = vmatpush1.msra.mxu0 %v304
    %335 = vmatprep.subr.mxu0 0.0
    %336 = vmatpush1.msra.mxu0 %v305
    %337 = vmatprep.subr.mxu0 0.0
    %338 = vmatpush1.msra.mxu0 %v306
    %339 = vmatprep.subr.mxu0 0.0
    %340 = vmatpush1.msra.mxu0 %v307
    %341 = vmatprep.subr.mxu0 0.0
    %342 = vmatpush1.msra.mxu0 %v308
    %343 = vmatprep.subr.mxu0 0.0
    %344 = vmatpush1.msra.mxu0 %v309
    %345 = vmatprep.subr.mxu0 0.0
    %346 = vmatpush1.msra.mxu0 %v310
    %347 = vmatprep.subr.mxu0 0.0
    %348 = vmatpush1.msra.mxu0 %v311
    %349 = vmatprep.subr.mxu0 0.0
    %350 = vmatpush1.msra.mxu0 0.0
    %351 = vmatprep.subr.mxu0 0.0
    %352 = vmatpush1.msra.mxu0 0.0
    %353 = vmatprep.subr.mxu0 0.0
    %354 = vmatpush1.msra.mxu0 0.0
    %355 = vmatprep.subr.mxu0 0.0
    %356 = vmatpush1.msra.mxu0 0.0
    %357 = vmatprep.subr.mxu0 0.0
    %358 = vmatpush1.msra.mxu0 0.0
    %359 = vmatprep.subr.mxu0 0.0
    %360 = vmatpush1.msra.mxu0 0.0
    %361 = vmatprep.subr.mxu0 0.0
    %362 = vmatpush1.msra.mxu0 0.0
    %363 = vmatprep.subr.mxu0 0.0
    %364 = vmatpush1.msra.mxu0 0.0
    %365 = vmatprep.subr.mxu0 0.0
    %366 = vmatpush1.msra.mxu0 0.0
    %367 = vmatprep.subr.mxu0 0.0
    %368 = vmatpush1.msra.mxu0 0.0
    %369 = vmatprep.subr.mxu0 0.0
    %370 = vmatpush1.msra.mxu0 0.0
    %371 = vmatprep.subr.mxu0 0.0
    %372 = vmatpush1.msra.mxu0 0.0
    %373 = vmatprep.subr.mxu0 0.0
    %374 = vmatpush1.msra.mxu0 0.0
    %375 = vmatprep.subr.mxu0 0.0
    %376 = vmatpush1.msra.mxu0 0.0
    %377 = vmatprep.subr.mxu0 0.0
    %378 = vmatpush1.msra.mxu0 0.0
    %379 = vmatprep.subr.mxu0 0.0
    %380 = vmatpush1.msra.mxu0 0.0
    %381 = vmatprep.mubr.f32.mxu0 0.0
    %382 = vmatmul.mubr.f32.gmra.mrb[0].mxu0 %v295
    %v383 = vpop.f32.mrb[0].mxu0
    %v384 = vadd.f32 %v316, %v383
    %v385 = vpop.f32.mrb[0].mxu0
    %386 = vdwg.mxu0
    %vm387 = vcmask 64512
    %388 = vst.msk [vmem:[#allocation5] sm:$0xff] %vm387, %v384
    // Predicated region
    $region14: #{tpu_custom_call.1} parent=1 // pred_check
      _
    $region15: #{tpu_custom_call.1} parent=1 // pred_check_branch
      %390 = sbr.rel (0) target = $region17
    $region16: #{tpu_custom_call.1} parent=1 // pred_region
      %s392 = ssub.s32 128, 128
      %393 = vsyncadd [#allocation4], %s392
      %s395 = sshll.u32 [#allocation5], 4
      %s396 = int_to_ptr.vmem [resolvable:$true] %s395
      %398 = dma.vmem_to_hbm [thread:$0]  %s396, 128, %s2, [#allocation4]
    $region17: #{tpu_custom_call.1} parent=1 // pred_fallthru
      _
    // Predicated region
    $region18: #{tpu_custom_call.1} parent=1 // pred_check
      _
    $region19: #{tpu_custom_call.1} parent=1 // pred_check_branch
      %400 = sbr.rel (0) target = $region21
    $region20: #{tpu_custom_call.1} parent=1 // pred_region
      %401 = dma.done [#allocation4], 128
    $region21: #{tpu_custom_call.1} parent=1 // pred_fallthru
      _
    %402 = vsyncpa [#allocation3], 1
    %403 = vsyncpa [#allocation4], 1

</llo_original>
